<compile_context>
chip_gen: v5e
topology: v5e:2x2
jax: 0.10.0
libtpu: 0.0.40
codegen_flags: <defaults>
</compile_context>

<pallas_src>
import jax
import jax.numpy as jnp
from jax.experimental import pallas as pl
from jax.experimental.pallas import tpu as pltpu

ALPHA = 30.0
BETA = 0.2
P_INIT = 0.0
LANES = 128
SUBLANES = 8
TILE = LANES * SUBLANES  # 1024 elements -> fully packed vregs


# ----------------------------------------------------------------------------
# Kernels
# ----------------------------------------------------------------------------
def _dopamine_step_kernel(p_ref, s_ref, reward_ref, p_new_ref):
    """One forward() step with scalar prediction P(t) (first PyTorch call)."""
    p = p_ref[0]                                  # SMEM scalar P(t)
    delta = s_ref[...] - p                        # prediction error delta(t)
    reward_ref[...] = ALPHA * delta               # DA_in-emp(t) = alpha * delta
    p_new_ref[...] = p + BETA * delta             # P(t+1) = P(t) + beta * delta


def _dopamine_seq_kernel(p0_ref, s_ref, reward_ref, p_ref):
    """Fused T-step recurrence.  grid=(T,).

    P(t) lives in the resident p_ref output block (same block index every
    step, so it never leaves VMEM mid-sequence), initialized from the scalar
    P(0) at t == 0 and written back to HBM only once at the end.
    """
    t = pl.program_id(0)

    @pl.when(t == 0)
    def _():
        p_ref[...] = jnp.full(p_ref.shape, p0_ref[0], dtype=jnp.float32)

    p = p_ref[...]
    delta = s_ref[...] - p
    reward_ref[...] = ALPHA * delta
    p_ref[...] = p + BETA * delta


# ----------------------------------------------------------------------------
# Layout helpers
# ----------------------------------------------------------------------------
def _pad_to_slab(flat):
    """Pad last dim of [..., N] to a multiple of 1024 and reshape to
    [..., rows, 128] with rows a multiple of 8 (fully dense vregs)."""
    n = flat.shape[-1]
    n_pad = ((n + TILE - 1) // TILE) * TILE
    if n_pad != n:
        pad_width = [(0, 0)] * (flat.ndim - 1) + [(0, n_pad - n)]
        flat = jnp.pad(flat, pad_width)
    slab = flat.reshape(flat.shape[:-1] + (n_pad // LANES, LANES))
    return slab, n


# ----------------------------------------------------------------------------
# Wrappers
# ----------------------------------------------------------------------------
def dopamine_empathy_reward(empathy_signal, p_state):
    """Single forward() step with scalar prediction state P(t) of shape [1].

    Returns (reward, p_new), both with the shape of empathy_signal (matching
    PyTorch, where self.p becomes S-shaped after the first call).
    """
    orig_shape = empathy_signal.shape
    flat = empathy_signal.astype(jnp.float32).reshape(-1)
    s2d, n = _pad_to_slab(flat)
    rows = s2d.shape[0]

    reward2d, p_new2d = pl.pallas_call(
        _dopamine_step_kernel,
        out_shape=(
            jax.ShapeDtypeStruct((rows, LANES), jnp.float32),
            jax.ShapeDtypeStruct((rows, LANES), jnp.float32),
        ),
        in_specs=[
            pl.BlockSpec(memory_space=pltpu.SMEM),        # P(t) scalar
            pl.BlockSpec((rows, LANES), lambda: (0, 0)),  # S(t) slab
        ],
        out_specs=(
            pl.BlockSpec((rows, LANES), lambda: (0, 0)),  # reward
            pl.BlockSpec((rows, LANES), lambda: (0, 0)),  # P(t+1)
        ),
        input_output_aliases={1: 0},                      # reward overwrites S
    )(p_state.astype(jnp.float32).reshape(1), s2d)

    reward = reward2d.reshape(-1)[:n].reshape(orig_shape)
    p_new = p_new2d.reshape(-1)[:n].reshape(orig_shape)
    return reward, p_new


def dopamine_empathy_reward_sequence(empathy_signals, p0):
    """Fused recurrence over T timesteps in ONE pallas_call.

    Args:
      empathy_signals: f32 [T, *signal_shape], the sequence S(0..T-1).
      p0:              f32 [1], initial scalar prediction P(0).

    Returns:
      rewards: [T, *signal_shape]  (alpha * delta(t) for every t)
      p_final: [*signal_shape]     (prediction state after the last step)
    """
    T = empathy_signals.shape[0]
    sig_shape = empathy_signals.shape[1:]
    flat = empathy_signals.astype(jnp.float32).reshape(T, -1)
    s3d, n = _pad_to_slab(flat)          # [T, rows, 128]
    rows = s3d.shape[1]

    rewards3d, p_final2d = pl.pallas_call(
        _dopamine_seq_kernel,
        grid=(T,),
        out_shape=(
            jax.ShapeDtypeStruct((T, rows, LANES), jnp.float32),
            jax.ShapeDtypeStruct((rows, LANES), jnp.float32),
        ),
        in_specs=[
            pl.BlockSpec(memory_space=pltpu.SMEM),                    # P(0) scalar
            pl.BlockSpec((None, rows, LANES), lambda t: (t, 0, 0)),   # S(t) slab
        ],
        out_specs=(
            pl.BlockSpec((None, rows, LANES), lambda t: (t, 0, 0)),   # reward(t)
            pl.BlockSpec((rows, LANES), lambda t: (0, 0)),            # resident P carry
        ),
        input_output_aliases={1: 0},                                  # rewards overwrite S
        compiler_params=pltpu.CompilerParams(
            dimension_semantics=("arbitrary",),                       # recurrence over t
        ),
    )(p0.astype(jnp.float32).reshape(1), s3d)

    rewards = rewards3d.reshape(T, -1)[:, :n].reshape((T,) + sig_shape)
    p_final = p_final2d.reshape(-1)[:n].reshape(sig_shape)
    return rewards, p_final


# ----------------------------------------------------------------------------
# Reference + demo / correctness check
# ----------------------------------------------------------------------------
def _reference(x_seq, p_init):
    """Pure-JAX reference of the exact PyTorch recurrence."""
    p = jnp.full(x_seq.shape[1:], p_init, dtype=jnp.float32)
    rewards = []
    for t in range(x_seq.shape[0]):
        delta = x_seq[t] - p
        rewards.append(ALPHA * delta)
        p = p + BETA * delta
    return jnp.stack(rewards), p


if __name__ == "__main__":
    key = jax.random.PRNGKey(0)
    T = 8
    p0 = jnp.array([P_INIT], dtype=jnp.float32)

    # --- Case 1: 128/1024-divisible NCHW signals [T, 2, 4, 16, 16] ----------
    k1, k2 = jax.random.split(key)
    x_seq = jax.random.normal(k1, (T, 2, 4, 16, 16), dtype=jnp.float32)

    rewards, p_final = dopamine_empathy_reward_sequence(x_seq, p0)
    rewards = jax.block_until_ready(rewards)
    p_final = jax.block_until_ready(p_final)

    reward0, p1 = dopamine_empathy_reward(x_seq[0], p0)
    reward0 = jax.block_until_ready(reward0)
    p1 = jax.block_until_ready(p1)

    ref_rewards, ref_p = _reference(x_seq, P_INIT)
    assert jnp.allclose(rewards, ref_rewards, atol=1e-4, rtol=1e-5)
    assert jnp.allclose(p_final, ref_p, atol=1e-4, rtol=1e-5)
    assert jnp.allclose(reward0, ref_rewards[0], atol=1e-4, rtol=1e-5)
    assert jnp.allclose(p1, p0 + BETA * (x_seq[0] - p0), atol=1e-4, rtol=1e-5)

    # --- Case 2: odd-sized signal (exercises the padding path) --------------
    x_seq_odd = jax.random.normal(k2, (T, 3, 5, 7), dtype=jnp.float32)
    rewards_odd, p_final_odd = dopamine_empathy_reward_sequence(x_seq_odd, p0)
    rewards_odd = jax.block_until_ready(rewards_odd)
    p_final_odd = jax.block_until_ready(p_final_odd)

    ref_rewards_odd, ref_p_odd = _reference(x_seq_odd, P_INIT)
    assert jnp.allclose(rewards_odd, ref_rewards_odd, atol=1e-4, rtol=1e-5)
    assert jnp.allclose(p_final_odd, ref_p_odd, atol=1e-4, rtol=1e-5)

    print("KERNEL_OK")
</pallas_src>

<mosaic_0001>
module attributes {stable_mosaic.version = 11 : i64} {
  func.func @_dopamine_seq_kernel(%arg0: i32, %arg1: memref<1xf32, #tpu.memory_space<smem>>, %arg2: memref<1x16x128xf32, #tpu.memory_space<vmem>>, %arg3: memref<1x16x128xf32, #tpu.memory_space<vmem>>, %arg4: memref<16x128xf32, #tpu.memory_space<vmem>>) attributes {dimension_semantics = [#tpu.dimension_semantics<arbitrary>], iteration_bounds = array<i64: 8>, scalar_prefetch = 0 : i64, scratch_operands = 0 : i64, tpu.core_type = #tpu.core_type<tc>, window_params = [{transform_indices = @transform_0, window_bounds = array<i64: 1>}, {transform_indices = @transform_1, window_bounds = array<i64: 1, 16, 128>}, {transform_indices = @transform_2, window_bounds = array<i64: 1, 16, 128>}, {pipeline_mode = #tpu.pipeline_mode<synchronous>, transform_indices = @transform_3, window_bounds = array<i64: 16, 128>}]} {
    %c0_i32 = arith.constant 0 : i32
    %0 = arith.cmpi eq, %arg0, %c0_i32 : i32
    %1 = arith.extui %0 : i1 to i32
    %c0_i32_0 = arith.constant 0 : i32
    %2 = arith.cmpi ne, %1, %c0_i32_0 : i32
    scf.if %2 {
      %c0_11 = arith.constant 0 : index
      %16 = memref.load %arg1[%c0_11] : memref<1xf32, #tpu.memory_space<smem>>
      %17 = vector.broadcast %16 : f32 to vector<16x128xf32>
      %c0_12 = arith.constant 0 : index
      %c0_13 = arith.constant 0 : index
      %18 = vector.load %arg4[%c0_12, %c0_13] : memref<16x128xf32, #tpu.memory_space<vmem>>, vector<16x128xf32>
      tpu.vector_store %arg4[%c0_12, %c0_13], %17 {strides = array<i32>} : memref<16x128xf32, #tpu.memory_space<vmem>>, vector<16x128xf32>,
    } else {
    }
    %c0 = arith.constant 0 : index
    %c0_1 = arith.constant 0 : index
    %3 = vector.load %arg4[%c0, %c0_1] : memref<16x128xf32, #tpu.memory_space<vmem>>, vector<16x128xf32>
    %c0_2 = arith.constant 0 : index
    %c0_3 = arith.constant 0 : index
    %c0_4 = arith.constant 0 : index
    %4 = vector.load %arg2[%c0_2, %c0_3, %c0_4] : memref<1x16x128xf32, #tpu.memory_space<vmem>>, vector<1x16x128xf32>
    %5 = vector.shape_cast %4 : vector<1x16x128xf32> to vector<16x128xf32>
    %6 = arith.subf %5, %3 : vector<16x128xf32>
    %cst = arith.constant 3.000000e+01 : f32
    %7 = vector.broadcast %cst : f32 to vector<16x128xf32>
    %8 = arith.mulf %7, %6 : vector<16x128xf32>
    %c0_5 = arith.constant 0 : index
    %c0_6 = arith.constant 0 : index
    %c0_7 = arith.constant 0 : index
    %9 = vector.load %arg3[%c0_5, %c0_6, %c0_7] : memref<1x16x128xf32, #tpu.memory_space<vmem>>, vector<1x16x128xf32>
    %10 = vector.shape_cast %9 : vector<1x16x128xf32> to vector<16x128xf32>
    %11 = vector.shape_cast %8 : vector<16x128xf32> to vector<1x16x128xf32>
    tpu.vector_store %arg3[%c0_5, %c0_6, %c0_7], %11 {strides = array<i32>} : memref<1x16x128xf32, #tpu.memory_space<vmem>>, vector<1x16x128xf32>,
    %cst_8 = arith.constant 2.000000e-01 : f32
    %12 = vector.broadcast %cst_8 : f32 to vector<16x128xf32>
    %13 = arith.mulf %12, %6 : vector<16x128xf32>
    %14 = arith.addf %3, %13 : vector<16x128xf32>
    %c0_9 = arith.constant 0 : index
    %c0_10 = arith.constant 0 : index
    %15 = vector.load %arg4[%c0_9, %c0_10] : memref<16x128xf32, #tpu.memory_space<vmem>>, vector<16x128xf32>
    tpu.vector_store %arg4[%c0_9, %c0_10], %14 {strides = array<i32>} : memref<16x128xf32, #tpu.memory_space<vmem>>, vector<16x128xf32>,
    return
  }
  func.func @transform_0(%arg0: i32) -> i32 {
    %c0_i32 = arith.constant 0 : i32
    %c0_i32_0 = arith.constant 0 : i32
    return %c0_i32 : i32
  }
  func.func @transform_1(%arg0: i32) -> (i32, i32, i32) {
    %c0_i32 = arith.constant 0 : i32
    %c0_i32_0 = arith.constant 0 : i32
    %c0_i32_1 = arith.constant 0 : i32
    return %arg0, %c0_i32, %c0_i32_0 : i32, i32, i32
  }
  func.func @transform_2(%arg0: i32) -> (i32, i32, i32) {
    %c0_i32 = arith.constant 0 : i32
    %c0_i32_0 = arith.constant 0 : i32
    %c0_i32_1 = arith.constant 0 : i32
    return %arg0, %c0_i32, %c0_i32_0 : i32, i32, i32
  }
  func.func @transform_3(%arg0: i32) -> (i32, i32) {
    %c0_i32 = arith.constant 0 : i32
    %c0_i32_0 = arith.constant 0 : i32
    %c0_i32_1 = arith.constant 0 : i32
    return %c0_i32, %c0_i32_0 : i32, i32
  }
}

</mosaic_0001>

<llo_original>
// kernel: tpu_custom_call.1
$region0: #{tpu_custom_call.1}
  #allocation0 [shape = 'u32[]', space=smem, size = 0x4, offset = 0x4, fixed_abs, tag = 'smem constant byte address 0x4 - core index']
  #allocation1 [shape = 'u32[72,128]{1,0:T(1,128)}', space=vmem, size = 0x9000, scoped, tag = 'internal scratch']
  #allocation2 [shape = 'f32[1]{0:T(128)S(6)}', space=smem, size = 0x200, scoped, tag = 'scoped memory for tpu_custom_call.1']
  %s0 = inlined_call_operand.<no memory space> [shape: f32[1], index: 0, kind: input, shape index: {}]
  %s1 = inlined_call_operand.hbm [shape: f32[8,16,128], index: 1, kind: input, shape index: {}, may-alias: {1,2}]
  %s2 = inlined_call_operand.hbm [shape: f32[8,16,128], index: 2, kind: output, shape index: {0}, may-alias: {1,2}]
  %s3 = inlined_call_operand.hbm [shape: f32[16,128], index: 3, kind: output, shape index: {1}]
  %4 = xla_tuple %s2, %s3
  %s5 = sld [smem:[#allocation0]]
  $region57: #{tpu_custom_call.1} parent=0
    _
  %s7 = ssub.s32 1, %s5
  %s8 = scalar_select 0, %s7, %s5
  %9 = sst [smem:[#allocation2]] %s0
  $region1: #{tpu_custom_call.1} parent=0
    #allocation3 [shape = 'u8[16384]{0}', space=vmem, size = 0x4000, scoped, tag = 'input window, operand 1']
    #allocation4 [shape = 's32[2]{0}', space=sflag, size = 0x8, scoped, tag = 'scoped memory for tpu_custom_call.1']
    #allocation5 [shape = 's32[2]{0}', space=sflag, size = 0x8, scoped, tag = 'scoped memory for tpu_custom_call.1']
    #allocation6 [shape = 'u8[16384]{0}', space=vmem, size = 0x4000, scoped, tag = 'output window, operand 0']
    #allocation7 [shape = 'u8[8192]{0}', space=vmem, size = 0x2000, scoped, tag = 'output window, operand 1, single buffered']
    #allocation8 [shape = 's32[1]{0}', space=sflag, size = 0x4, scoped, tag = 'scoped memory for tpu_custom_call.1']
    %10 = vsyncpa [#allocation4], 0
    %s11 = scalar_lea.sflag [#allocation4], 1
    %12 = vsyncpa %s11, 0
    %13 = vsyncpa [#allocation5], 0
    %s14 = scalar_lea.sflag [#allocation5], 1
    %15 = vsyncpa %s14, 0
    %16 = vsyncpa [#allocation8], 0
    loop: start=0, step=1, limit=10
    $region2: #{tpu_custom_call.1} parent=1 // loop_pre_header
      _
    $region3: #{tpu_custom_call.1} parent=1 // loop_header
      %s18 = sphi 0, %s22
      %p19 = scmp.ge.s32.totalorder %s18, 10
      %s26 = sphi 0, %s26
      %s28 = sphi 0, %s26
      %s29 = sphi 0, %s28
      %s43 = sphi 0, %s29
      %s49 = sphi 0, %s51
      %s52 = sphi 0, %s49
      %s53 = sphi 0, %s52
      %s69 = sphi 0, %s53
      %s75 = sphi 0, %s77
      %s78 = sphi 0, %s75
      %s79 = sphi 0, %s78
      %s95 = sphi 0, %s79
      %s99 = sphi 0, %s99
      %s101 = sphi 0, %s99
      %s102 = sphi 0, %s101
      %s116 = sphi 0, %s102
    $region4: #{tpu_custom_call.1} parent=1 // loop_header_branch
      %21 = sbr.rel (%p19) target = $region8
    $region5: #{tpu_custom_call.1} parent=1 // loop_body
      %s23 = ssub.s32 %s18, 1
      %s24 = ssub.s32 %s18, 2
      %s25 = sadd.s32 %s18, 1
      %s27 = sadd.s32 %s26, 1
      %p30 = scmp.eq.s32.totalorder %s18, 7
      %p31 = scmp.ne.s32.totalorder %s26, %s28
      %p32 = scmp.eq.s32.totalorder %s18, 0
      %p33 = por %p31, %p32
      %p34 = scmp.ne.s32.totalorder %s26, %s28
      %p35 = scmp.eq.s32.totalorder %s23, 7
      %p36 = por %p34, %p35
      %p37 = scmp.ne.s32.totalorder %s28, %s29
      %p38 = scmp.eq.s32.totalorder %s23, 0
      %p39 = por %p37, %p38
      %p40 = scmp.ne.s32.totalorder %s28, %s29
      %p41 = scmp.eq.s32.totalorder %s24, 7
      %p42 = por %p40, %p41
      %p44 = scmp.ne.s32.totalorder %s29, %s43
      %p45 = scmp.eq.s32.totalorder %s24, 0
      %p46 = por %p44, %p45
      %s47 = ssub.s32 %s18, %s25
      %p48 = scmp.eq.s32.totalorder %s47, 0
      %s50 = sadd.s32 %s49, 1
      %s51 = scalar_select %p48, %s49, %s50
      %p54 = pneg %p48
      %p55 = scmp.eq.s32.totalorder %s18, 7
      %p56 = por %p54, %p55
      %p57 = scmp.ne.s32.totalorder %s49, %s52
      %p58 = scmp.eq.s32.totalorder %s18, 0
      %p59 = por %p57, %p58
      %p60 = scmp.ne.s32.totalorder %s49, %s52
      %p61 = scmp.eq.s32.totalorder %s23, 7
      %p62 = por %p60, %p61
      %p63 = scmp.ne.s32.totalorder %s52, %s53
      %p64 = scmp.eq.s32.totalorder %s23, 0
      %p65 = por %p63, %p64
      %p66 = scmp.ne.s32.totalorder %s52, %s53
      %p67 = scmp.eq.s32.totalorder %s24, 7
      %p68 = por %p66, %p67
      %p70 = scmp.ne.s32.totalorder %s53, %s69
      %p71 = scmp.eq.s32.totalorder %s24, 0
      %p72 = por %p70, %p71
      %s73 = ssub.s32 %s18, %s25
      %p74 = scmp.eq.s32.totalorder %s73, 0
      %s76 = sadd.s32 %s75, 1
      %s77 = scalar_select %p74, %s75, %s76
      %p80 = pneg %p74
      %p81 = scmp.eq.s32.totalorder %s18, 7
      %p82 = por %p80, %p81
      %p83 = scmp.ne.s32.totalorder %s75, %s78
      %p84 = scmp.eq.s32.totalorder %s18, 0
      %p85 = por %p83, %p84
      %p86 = scmp.ne.s32.totalorder %s75, %s78
      %p87 = scmp.eq.s32.totalorder %s23, 7
      %p88 = por %p86, %p87
      %p89 = scmp.ne.s32.totalorder %s78, %s79
      %p90 = scmp.eq.s32.totalorder %s23, 0
      %p91 = por %p89, %p90
      %p92 = scmp.ne.s32.totalorder %s78, %s79
      %p93 = scmp.eq.s32.totalorder %s24, 7
      %p94 = por %p92, %p93
      %p96 = scmp.ne.s32.totalorder %s79, %s95
      %p97 = scmp.eq.s32.totalorder %s24, 0
      %p98 = por %p96, %p97
      %s100 = sadd.s32 %s99, 1
      %p103 = scmp.eq.s32.totalorder %s18, 7
      %p104 = scmp.ne.s32.totalorder %s99, %s101
      %p105 = scmp.eq.s32.totalorder %s18, 0
      %p106 = por %p104, %p105
      %p107 = scmp.ne.s32.totalorder %s99, %s101
      %p108 = scmp.eq.s32.totalorder %s23, 7
      %p109 = por %p107, %p108
      %p110 = scmp.ne.s32.totalorder %s101, %s102
      %p111 = scmp.eq.s32.totalorder %s23, 0
      %p112 = por %p110, %p111
      %p113 = scmp.ne.s32.totalorder %s101, %s102
      %p114 = scmp.eq.s32.totalorder %s24, 7
      %p115 = por %p113, %p114
      %p117 = scmp.ne.s32.totalorder %s102, %s116
      %p118 = scmp.eq.s32.totalorder %s24, 0
      %p119 = por %p117, %p118
      %p120 = scmp.le.s32.totalorder 1, %s18
      %p121 = scmp.lt.s32.totalorder %s18, 9
      %p122 = pnand %p120, %p121
      %p123 = pneg %p122
      // Predicated region
      $region9: #{tpu_custom_call.1} parent=5 // pred_check
        _
      $region10: #{tpu_custom_call.1} parent=5 // pred_check_branch
        %125 = sbr.rel (%p122) target = $region12
      $region11: #{tpu_custom_call.1} parent=5 // pred_region
        %s126 = ssub.s32 %s18, 1
        // Predicated region
        $region13: #{tpu_custom_call.1} parent=11 // pred_check
          %p127 = pneg %p39
        $region14: #{tpu_custom_call.1} parent=11 // pred_check_branch
          %129 = sbr.rel (%p127) target = $region16
        $region15: #{tpu_custom_call.1} parent=11 // pred_region
          _
        $region16: #{tpu_custom_call.1} parent=11 // pred_fallthru
          _
      $region12: #{tpu_custom_call.1} parent=5 // pred_fallthru
        _
      %p130 = scmp.lt.s32.totalorder %s18, 8
      // Predicated region
      $region17: #{tpu_custom_call.1} parent=5 // pred_check
        %p131 = pneg %p130
      $region18: #{tpu_custom_call.1} parent=5 // pred_check_branch
        %133 = sbr.rel (%p131) target = $region20
      $region19: #{tpu_custom_call.1} parent=5 // pred_region
        // Predicated region
        $region21: #{tpu_custom_call.1} parent=19 // pred_check
          %p134 = pneg %p59
        $region22: #{tpu_custom_call.1} parent=19 // pred_check_branch
          %136 = sbr.rel (%p134) target = $region24
        $region23: #{tpu_custom_call.1} parent=19 // pred_region
          %s137 = sand.u32 %s49, 1
          %s138 = scalar_lea.sflag [#allocation4], %s137
          %s139 = sand.u32 %s49, 1
          %s140 = smul.addr %s139, 16
          %s141 = scalar_lea.vmem [#allocation3], %s140
          %143 = vsyncadd %s138, 0
          %s144 = smul.addr %s18, 2
          %s145 = smul.addr %s144, 8
          %s146 = scalar_lea.hbm %s1, %s145
          %s147 = sshll.u32 %s146, 4
          %s148 = int_to_ptr.hbm [resolvable:$true] %s147
          %s149 = sshll.u32 %s141, 4
          %s150 = int_to_ptr.vmem [resolvable:$true] %s149
          %155 = dma.hbm_to_vmem [thread:$0]  %s148, 256, %s150, %s138, 128, 128, 8
        $region24: #{tpu_custom_call.1} parent=19 // pred_fallthru
          _
      $region20: #{tpu_custom_call.1} parent=5 // pred_fallthru
        _
      %p156 = scmp.le.s32.totalorder 1, %s18
      %p157 = scmp.lt.s32.totalorder %s18, 9
      %p158 = pnand %p156, %p157
      %p159 = pneg %p158
      // Predicated region
      $region25: #{tpu_custom_call.1} parent=5 // pred_check
        _
      $region26: #{tpu_custom_call.1} parent=5 // pred_check_branch
        %161 = sbr.rel (%p158) target = $region28
      $region27: #{tpu_custom_call.1} parent=5 // pred_region
        %s162 = ssub.s32 %s18, 1
        %s163 = sand.u32 %s52, 1
        %s164 = scalar_lea.sflag [#allocation4], %s163
        %s165 = sand.u32 %s52, 1
        %s166 = smul.addr %s165, 16
        %s167 = scalar_lea.vmem [#allocation3], %s166
        // Predicated region
        $region29: #{tpu_custom_call.1} parent=27 // pred_check
          %p168 = pneg %p65
        $region30: #{tpu_custom_call.1} parent=27 // pred_check_branch
          %170 = sbr.rel (%p168) target = $region32
        $region31: #{tpu_custom_call.1} parent=27 // pred_region
          %172 = dma.done %s164, 256
        $region32: #{tpu_custom_call.1} parent=27 // pred_fallthru
          _
        %p173 = pneg %p39
        %p174 = pneg %p36
        %s175 = sand.u32 %s52, 1
        %s176 = scalar_lea.sflag [#allocation4], %s175
        %s177 = sand.u32 %s52, 1
        %s178 = smul.addr %s177, 16
        %s179 = scalar_lea.vmem [#allocation3], %s178
        %p180 = pneg %p65
        %p181 = pneg %p62
        %p182 = pneg %p91
        %p183 = pneg %p88
        %s184 = sand.u32 %s78, 1
        %s185 = scalar_lea.sflag [#allocation5], %s184
        %s186 = sand.u32 %s78, 1
        %s187 = smul.addr %s186, 16
        %s188 = scalar_lea.vmem [#allocation6], %s187
        %p189 = pneg %p112
        %p190 = pneg %p109
        %p191 = scmp.eq.s32.totalorder %s23, 0
        // Predicated region
        $region33: #{tpu_custom_call.1} parent=27 // pred_check
          %p192 = pneg %p191
        $region34: #{tpu_custom_call.1} parent=27 // pred_check_branch
          %194 = sbr.rel (%p192) target = $region36
        $region35: #{tpu_custom_call.1} parent=27 // pred_region
          %s195 = sld [smem:[#allocation2]]
          %v196 = vstv %s195
          %197 = vst [vmem:[#allocation7] sm:$0xff] %v196
          %198 = vst [vmem:[#allocation7 + $0x8] sm:$0xff] %v196
        $region36: #{tpu_custom_call.1} parent=27 // pred_fallthru
          _
        %v199 = vld [vmem:[#allocation7] sm:$0xff]
        %v200 = vld [vmem:[#allocation7 + $0x8] sm:$0xff]
        %v201 = vld [vmem:[%s167] sm:$0xff]
        %v202 = vld [vmem:[%s167 + $0x8] sm:$0xff]
        %v203 = vsub.f32 %v201, %v199
        %v204 = vsub.f32 %v202, %v200
        %v205 = vmul.f32 %v203, 30.0
        %v206 = vmul.f32 %v204, 30.0
        %207 = vst [vmem:[%s188] sm:$0xff] %v205
        %208 = vst [vmem:[%s188 + $0x8] sm:$0xff] %v206
        %v209 = vmul.f32 %v203, 0.2
        %v210 = vmul.f32 %v204, 0.2
        %v211 = vadd.f32 %v199, %v209
        %v212 = vadd.f32 %v200, %v210
        %213 = vst [vmem:[#allocation7] sm:$0xff] %v211
        %214 = vst [vmem:[#allocation7 + $0x8] sm:$0xff] %v212
        %s215 = sand.u32 %s78, 1
        %s216 = scalar_lea.sflag [#allocation5], %s215
        %s217 = sand.u32 %s78, 1
        %s218 = smul.addr %s217, 16
        %s219 = scalar_lea.vmem [#allocation6], %s218
        // Predicated region
        $region37: #{tpu_custom_call.1} parent=27 // pred_check
          %p220 = pneg %p88
        $region38: #{tpu_custom_call.1} parent=27 // pred_check_branch
          %222 = sbr.rel (%p220) target = $region40
        $region39: #{tpu_custom_call.1} parent=27 // pred_region
          %224 = vsyncadd %s216, 0
          %s225 = smul.addr %s23, 2
          %s226 = smul.addr %s225, 8
          %s227 = scalar_lea.hbm %s2, %s226
          %s228 = sshll.u32 %s219, 4
          %s229 = int_to_ptr.vmem [resolvable:$true] %s228
          %s230 = sshll.u32 %s227, 4
          %s231 = int_to_ptr.hbm [resolvable:$true] %s230
          %236 = dma.vmem_to_hbm [thread:$0]  %s229, 256, %s231, %s216, 128, 128, 8
        $region40: #{tpu_custom_call.1} parent=27 // pred_fallthru
          _
        // Predicated region
        $region41: #{tpu_custom_call.1} parent=27 // pred_check
          %p237 = pneg %p109
        $region42: #{tpu_custom_call.1} parent=27 // pred_check_branch
          %239 = sbr.rel (%p237) target = $region44
        $region43: #{tpu_custom_call.1} parent=27 // pred_region
          %241 = vsyncadd [#allocation8], 0
          %s242 = sshll.u32 [#allocation7], 4
          %s243 = int_to_ptr.vmem [resolvable:$true] %s242
          %s244 = sshll.u32 %s3, 4
          %s245 = int_to_ptr.hbm [resolvable:$true] %s244
          %250 = dma.vmem_to_hbm [thread:$0]  %s243, 256, %s245, [#allocation8], 128, 128, 8
        $region44: #{tpu_custom_call.1} parent=27 // pred_fallthru
          _
        // Predicated region
        $region45: #{tpu_custom_call.1} parent=27 // pred_check
          %p251 = pneg %p109
        $region46: #{tpu_custom_call.1} parent=27 // pred_check_branch
          %253 = sbr.rel (%p251) target = $region48
        $region47: #{tpu_custom_call.1} parent=27 // pred_region
          %255 = dma.done [#allocation8], 256
        $region48: #{tpu_custom_call.1} parent=27 // pred_fallthru
          _
      $region28: #{tpu_custom_call.1} parent=5 // pred_fallthru
        _
      %p256 = scmp.le.s32.totalorder 2, %s18
      // Predicated region
      $region49: #{tpu_custom_call.1} parent=5 // pred_check
        %p257 = pneg %p256
      $region50: #{tpu_custom_call.1} parent=5 // pred_check_branch
        %259 = sbr.rel (%p257) target = $region52
      $region51: #{tpu_custom_call.1} parent=5 // pred_region
        %s260 = ssub.s32 %s18, 2
        // Predicated region
        $region53: #{tpu_custom_call.1} parent=51 // pred_check
          %p261 = pneg %p94
        $region54: #{tpu_custom_call.1} parent=51 // pred_check_branch
          %263 = sbr.rel (%p261) target = $region56
        $region55: #{tpu_custom_call.1} parent=51 // pred_region
          %s264 = sand.u32 %s79, 1
          %s265 = scalar_lea.sflag [#allocation5], %s264
          %s266 = sand.u32 %s79, 1
          %s267 = smul.addr %s266, 16
          %s268 = scalar_lea.vmem [#allocation6], %s267
          %270 = dma.done %s265, 256
        $region56: #{tpu_custom_call.1} parent=51 // pred_fallthru
          _
      $region52: #{tpu_custom_call.1} parent=5 // pred_fallthru
        _
    $region6: #{tpu_custom_call.1} parent=1 // loop_footer
      %s22 = sadd.s32 1, %s18
    $region7: #{tpu_custom_call.1} parent=1 // loop_footer_branch
      %17 = sbr.rel target = $region3
    $region8: #{tpu_custom_call.1} parent=1 // loop_exit
      _
    %271 = vsyncpa [#allocation4], 1
    %s272 = scalar_lea.sflag [#allocation4], 1
    %273 = vsyncpa %s272, 1
    %274 = vsyncpa [#allocation5], 1
    %s275 = scalar_lea.sflag [#allocation5], 1
    %276 = vsyncpa %s275, 1
    %277 = vsyncpa [#allocation8], 1

</llo_original>
